<compile_context>
chip_gen: v6e
topology: v6e:2x2x1
jax: 0.10.0
libtpu: 0.0.40
codegen_flags: <defaults>
</compile_context>

<pallas_src>
import functools

import jax
import jax.numpy as jnp
from jax.experimental import pallas as pl
from jax.experimental.pallas import tpu as pltpu


def _round_up(x, m):
    return (x + m - 1) // m * m


def _vmem_budget_bytes():
    """Generation-aware usable-VMEM budget (~75% of physical capacity)."""
    cap = 64 * 1024 * 1024  # conservative fallback (v7x per-core VMEM)
    try:
        info = pltpu.get_tpu_info()
        cap = int(getattr(info, "vmem_capacity_bytes", cap))
    except Exception:
        pass
    return (cap * 3) // 4


def _default_tm(batch, input_dim, dp, out_cols, x_itemsize, out_itemsize, sub,
                avail_bytes):
    """Largest row tile (multiple of `sub`, <= 1024) whose working set fits
    `avail_bytes` (= VMEM budget minus the resident fused weights)."""
    per_row = (2 * input_dim * x_itemsize      # x tile (double-buffered)
               + 2 * out_cols * out_itemsize   # out tile (double-buffered)
               + input_dim * 2                 # in-kernel bf16 copy of x
               + 2 * dp * 4                    # f32 y = x @ W intermediate
               + dp * 4)                       # gated-product temp / slack
    avail = max(avail_bytes, per_row * sub)
    tm = min(1024, avail // per_row, _round_up(batch, sub))
    # Guarantee >= 2 grid steps for moderate/large batches so the "parallel"
    # batch axis can shard across v7x's two TensorCores (no-op on 1-TC chips;
    # tiles >= 256 rows keep the DMA efficient).
    if batch > 512:
        tm = min(tm, max(256, _round_up((batch + 1) // 2, sub)))
    return max(sub, (tm // sub) * sub)


def _ktiled_sizes(batch, input_dim, two_dp, x_itemsize, out_cols, out_itemsize,
                  sub, budget):
    """(tm, tk) for the K-tiled path where weight K-slices stream through VMEM."""
    tk = 1024
    # Double-buffered (tk, 2*dp) weight slice should use at most ~half the budget.
    while tk > 128 and 2 * tk * two_dp * 2 > budget // 2:
        tk //= 2
    tk = min(tk, _round_up(input_dim, 128))
    fixed = 2 * tk * two_dp * 2 + two_dp * 4          # weight slices + bias
    per_row = (2 * tk * x_itemsize + tk * 2           # x tiles + bf16 copy
               + 2 * out_cols * out_itemsize          # out tile
               + two_dp * 4                           # f32 accumulator scratch
               + two_dp * 4)                          # f32 epilogue temp
    avail = max(budget - fixed, per_row * sub)
    tm = min(512, avail // per_row, _round_up(batch, sub))
    return max(sub, (tm // sub) * sub), tk


def _gate_kernel(x_ref, w_ref, b_ref, o_ref):
    # x_ref : (tm, K)         activation tile (input dtype)
    # w_ref : (K, 2*dp)       fused weights: cols [0:dp]->a, [dp:2dp]->b
    # b_ref : (1, 2*dp)       fused f32 bias
    # o_ref : (tm, out_cols)  gated output tile
    dp = w_ref.shape[-1] // 2
    oc = o_ref.shape[-1]
    x = x_ref[...].astype(w_ref.dtype)                 # cheap VPU cast
    y = jnp.dot(x, w_ref[...], preferred_element_type=jnp.float32)
    y = y + b_ref[...]                                  # f32 epilogue
    # activate = nn.Identity()  =>  gate is a plain elementwise product.
    o_ref[...] = (y[:, :oc] * y[:, dp:dp + oc]).astype(o_ref.dtype)


def _gate_kernel_ktiled(x_ref, w_ref, b_ref, o_ref, acc_ref, *, true_k):
    # Grid axis 1 streams K-slices of the fused weight through VMEM; acc_ref is
    # the f32 (tm, 2*dp) accumulator.  Bias + gate run on the last K step.
    k = pl.program_id(1)
    tk = x_ref.shape[-1]

    @pl.when(k == 0)
    def _():
        acc_ref[...] = jnp.zeros_like(acc_ref)

    x = x_ref[...].astype(w_ref.dtype)
    w = w_ref[...]
    if true_k % tk != 0:
        # Ragged K: zero the out-of-range columns/rows of the partial last
        # block (their VMEM contents are undefined) so they contribute nothing.
        base = k * tk
        xcol = jax.lax.broadcasted_iota(jnp.int32, x.shape, 1) + base
        x = jnp.where(xcol < true_k, x, 0).astype(w_ref.dtype)
        wrow = jax.lax.broadcasted_iota(jnp.int32, w.shape, 0) + base
        w = jnp.where(wrow < true_k, w, 0).astype(w_ref.dtype)
    acc_ref[...] += jnp.dot(x, w, preferred_element_type=jnp.float32)

    @pl.when(k == pl.num_programs(1) - 1)
    def _():
        dp = w_ref.shape[-1] // 2
        oc = o_ref.shape[-1]
        y = acc_ref[...] + b_ref[...]
        o_ref[...] = (y[:, :oc] * y[:, dp:dp + oc]).astype(o_ref.dtype)


def prepare_gate_params(weight, bias, *, compute_dtype=jnp.bfloat16):
    """One-time parameter prep (hoisted out of the per-call path).

    weight : (2*output_dim, input_dim)   PyTorch nn.Linear layout
    bias   : (2*output_dim,)

    Returns (w_fused, b_fused, output_dim) with
      w_fused : (input_dim, 2*dp) compute_dtype,  dp = round_up(output_dim, 128)
      b_fused : (1, 2*dp) float32
    Columns [0:dp] produce the "a" half, [dp:2*dp] the "b" half; padded columns
    carry zero weight / zero bias so they contribute nothing.  Pass
    compute_dtype=jnp.float32 for a full-precision (slower) matmul.
    """
    weight = jnp.asarray(weight)
    bias = jnp.asarray(bias)
    two_out, input_dim = weight.shape
    output_dim = two_out // 2
    dp = _round_up(output_dim, 128)

    wa = weight[:output_dim, :].T        # (input_dim, output_dim) -> "a" half
    wb = weight[output_dim:, :].T        # (input_dim, output_dim) -> "b" half

    w_fused = jnp.zeros((input_dim, 2 * dp), dtype=compute_dtype)
    w_fused = w_fused.at[:, :output_dim].set(wa.astype(compute_dtype))
    w_fused = w_fused.at[:, dp:dp + output_dim].set(wb.astype(compute_dtype))

    b_fused = jnp.zeros((1, 2 * dp), dtype=jnp.float32)
    b_fused = b_fused.at[0, :output_dim].set(bias[:output_dim].astype(jnp.float32))
    b_fused = b_fused.at[0, dp:dp + output_dim].set(
        bias[output_dim:].astype(jnp.float32))

    return w_fused, b_fused, output_dim


def gate_block(x, w_fused, b_fused, output_dim, *, tm=None, tk=None,
               out_dtype=None, force_k_tiling=False):
    """GateBlock forward using pre-fused params from prepare_gate_params().

    x : (batch, input_dim).  Returns (batch, output_dim) in `out_dtype`
    (default x.dtype; pass jnp.bfloat16 to halve output HBM writeback).
    """
    batch, input_dim = x.shape
    two_dp = w_fused.shape[1]
    dp = two_dp // 2
    assert w_fused.shape[0] == input_dim
    assert output_dim <= dp
    out_dtype = jnp.dtype(x.dtype if out_dtype is None else out_dtype)

    sub = 8 if x.dtype.itemsize >= 4 else 16
    budget = _vmem_budget_bytes()
    w_itemsize = jnp.dtype(w_fused.dtype).itemsize
    resident_w_bytes = input_dim * two_dp * w_itemsize + two_dp * 4
    use_resident = (not force_k_tiling) and resident_w_bytes <= (budget * 7) // 10

    compiler_params = pltpu.CompilerParams(
        dimension_semantics=("parallel",) if use_resident
        else ("parallel", "arbitrary"),
        vmem_limit_bytes=int(budget))

    out_shape = jax.ShapeDtypeStruct((batch, output_dim), out_dtype)

    def _const_spec(shape, index_map, single_buffer):
        # Grid-invariant operands: single-buffer them so only one VMEM copy of
        # the fused weights/bias stays resident (halves their footprint).
        if single_buffer:
            return pl.BlockSpec(shape, index_map, pipeline_mode=pl.Buffered(1))
        return pl.BlockSpec(shape, index_map)

    if use_resident:
        tm_ = tm
        if tm_ is None:
            tm_ = _default_tm(batch, input_dim, dp, output_dim,
                              x.dtype.itemsize, out_dtype.itemsize, sub,
                              budget - resident_w_bytes)
        tm_ = max(sub, _round_up(tm_, sub))
        tm_ = min(tm_, _round_up(batch, sub))
        grid = (pl.cdiv(batch, tm_),)

        def _run(single_buffer):
            return pl.pallas_call(
                _gate_kernel,
                out_shape=out_shape,
                grid_spec=pltpu.PrefetchScalarGridSpec(
                    num_scalar_prefetch=0,
                    grid=grid,
                    in_specs=[
                        pl.BlockSpec((tm_, input_dim), lambda i: (i, 0)),
                        _const_spec((input_dim, two_dp), lambda i: (0, 0),
                                    single_buffer),
                        _const_spec((1, two_dp), lambda i: (0, 0),
                                    single_buffer),
                    ],
                    out_specs=pl.BlockSpec((tm_, output_dim), lambda i: (i, 0)),
                ),
                compiler_params=compiler_params,
            )(x, w_fused, b_fused)
    else:
        tm_, tk_ = tm, tk
        if tm_ is None or tk_ is None:
            d_tm, d_tk = _ktiled_sizes(batch, input_dim, two_dp,
                                       x.dtype.itemsize, output_dim,
                                       out_dtype.itemsize, sub, budget)
            tm_ = d_tm if tm_ is None else tm_
            tk_ = d_tk if tk_ is None else tk_
        tm_ = max(sub, _round_up(tm_, sub))
        tm_ = min(tm_, _round_up(batch, sub))
        tk_ = max(128, _round_up(tk_, 128))
        tk_ = min(tk_, _round_up(input_dim, 128))
        grid = (pl.cdiv(batch, tm_), pl.cdiv(input_dim, tk_))
        kernel = functools.partial(_gate_kernel_ktiled, true_k=input_dim)

        def _run(single_buffer):
            return pl.pallas_call(
                kernel,
                out_shape=out_shape,
                grid_spec=pltpu.PrefetchScalarGridSpec(
                    num_scalar_prefetch=0,
                    grid=grid,
                    in_specs=[
                        pl.BlockSpec((tm_, tk_), lambda i, k: (i, k)),
                        pl.BlockSpec((tk_, two_dp), lambda i, k: (k, 0)),
                        _const_spec((1, two_dp), lambda i, k: (0, 0),
                                    single_buffer),
                    ],
                    out_specs=pl.BlockSpec((tm_, output_dim),
                                           lambda i, k: (i, 0)),
                    scratch_shapes=[pltpu.VMEM((tm_, two_dp), jnp.float32)],
                ),
                compiler_params=compiler_params,
            )(x, w_fused, b_fused)

    try:
        return _run(True)
    except Exception:
        # Fallback for jax versions without BlockSpec(pipeline_mode=pl.Buffered(1)):
        # double-buffered grid-invariant operands (previous behavior).
        return _run(False)


def gate_block_ref(x, weight, bias):
    """Pure-JAX f32 reference mirroring the PyTorch forward exactly."""
    y = x @ weight.T + bias
    a, b = jnp.split(y, 2, axis=-1)
    return a * b  # activate = Identity


if __name__ == "__main__":
    key = jax.random.PRNGKey(0)
    k_x, k_w, k_b, k_x2, k_w2, k_b2 = jax.random.split(key, 6)

    # ---- Test 1: small shape matching the quant-finance module (resident path).
    batch, input_dim, output_dim = 16, 32, 32
    x = jax.random.normal(k_x, (batch, input_dim), dtype=jnp.float32)
    bound = 1.0 / (input_dim ** 0.5)
    weight = jax.random.uniform(k_w, (2 * output_dim, input_dim), jnp.float32,
                                -bound, bound)
    bias = jax.random.uniform(k_b, (2 * output_dim,), jnp.float32,
                              -bound, bound)
    w_fused, b_fused, od = prepare_gate_params(weight, bias)
    out = jax.block_until_ready(gate_block(x, w_fused, b_fused, od))
    ref = gate_block_ref(x, weight, bias)
    assert out.shape == (batch, output_dim)
    # Loose tolerance: kernel matmul runs in bf16 (f32 accumulate); ref is f32.
    assert jnp.allclose(out, ref, atol=5e-2, rtol=5e-2), "resident path mismatch"

    # ---- Test 2: exercise the K-tiled fallback (forced) with ragged
    #      batch / K / output_dim (partial blocks + in-kernel K masking).
    b2, k2, o2 = 24, 160, 40
    x2 = jax.random.normal(k_x2, (b2, k2), dtype=jnp.float32)
    bound2 = 1.0 / (k2 ** 0.5)
    weight2 = jax.random.uniform(k_w2, (2 * o2, k2), jnp.float32,
                                 -bound2, bound2)
    bias2 = jax.random.uniform(k_b2, (2 * o2,), jnp.float32, -bound2, bound2)
    wf2, bf2, od2 = prepare_gate_params(weight2, bias2)
    out2 = jax.block_until_ready(
        gate_block(x2, wf2, bf2, od2, tm=16, tk=128, force_k_tiling=True))
    ref2 = gate_block_ref(x2, weight2, bias2)
    assert out2.shape == (b2, o2)
    assert jnp.allclose(out2, ref2, atol=5e-2, rtol=5e-2), "k-tiled path mismatch"

    print("KERNEL_OK")
</pallas_src>

<mosaic_0001>
module attributes {stable_mosaic.version = 11 : i64} {
  func.func @_gate_kernel(%arg0: i32, %arg1: memref<16x32xf32, #tpu.memory_space<vmem>>, %arg2: memref<32x256xbf16, #tpu.memory_space<vmem>>, %arg3: memref<1x256xf32, #tpu.memory_space<vmem>>, %arg4: memref<16x32xf32, #tpu.memory_space<vmem>>) attributes {dimension_semantics = [#tpu.dimension_semantics<parallel>], iteration_bounds = array<i64: 1>, scalar_prefetch = 0 : i64, scratch_operands = 0 : i64, tpu.core_type = #tpu.core_type<tc>, window_params = [{transform_indices = @transform_0, window_bounds = array<i64: 16, 32>}, {pipeline_mode = #tpu.pipeline_mode<synchronous>, transform_indices = @transform_1, window_bounds = array<i64: 32, 256>}, {pipeline_mode = #tpu.pipeline_mode<synchronous>, transform_indices = @transform_2, window_bounds = array<i64: 1, 256>}, {transform_indices = @transform_3, window_bounds = array<i64: 16, 32>}]} {
    %c0 = arith.constant 0 : index
    %c0_0 = arith.constant 0 : index
    %0 = vector.load %arg1[%c0, %c0_0] : memref<16x32xf32, #tpu.memory_space<vmem>>, vector<16x32xf32>
    %1 = arith.truncf %0 : vector<16x32xf32> to vector<16x32xbf16>
    %c0_1 = arith.constant 0 : index
    %c0_2 = arith.constant 0 : index
    %2 = vector.load %arg2[%c0_1, %c0_2] : memref<32x256xbf16, #tpu.memory_space<vmem>>, vector<32x256xbf16>
    %cst = arith.constant dense<0.000000e+00> : vector<16x256xf32>
    %3 = tpu.matmul %1, %2, %cst {dimension_numbers = #tpu.dot_dimension_numbers<[1], [0], [0], [1], [0, 0, 1, 1], [], []>} : vector<16x32xbf16>, vector<32x256xbf16>, vector<16x256xf32> -> vector<16x256xf32>
    %c0_3 = arith.constant 0 : index
    %c0_4 = arith.constant 0 : index
    %4 = vector.load %arg3[%c0_3, %c0_4] : memref<1x256xf32, #tpu.memory_space<vmem>>, vector<1x256xf32>
    %5 = vector.broadcast %4 : vector<1x256xf32> to vector<16x256xf32>
    %6 = arith.addf %3, %5 : vector<16x256xf32>
    %7 = vector.extract_strided_slice %6 {offsets = [0, 0], sizes = [16, 32], strides = [1, 1]} : vector<16x256xf32> to vector<16x32xf32>
    %8 = vector.extract_strided_slice %6 {offsets = [0, 128], sizes = [16, 32], strides = [1, 1]} : vector<16x256xf32> to vector<16x32xf32>
    %9 = arith.mulf %7, %8 : vector<16x32xf32>
    %c0_5 = arith.constant 0 : index
    %c0_6 = arith.constant 0 : index
    %10 = vector.load %arg4[%c0_5, %c0_6] : memref<16x32xf32, #tpu.memory_space<vmem>>, vector<16x32xf32>
    tpu.vector_store %arg4[%c0_5, %c0_6], %9 {strides = array<i32>} : memref<16x32xf32, #tpu.memory_space<vmem>>, vector<16x32xf32>,
    return
  }
  func.func @transform_0(%arg0: i32) -> (i32, i32) {
    %c0_i32 = arith.constant 0 : i32
    %c0_i32_0 = arith.constant 0 : i32
    return %arg0, %c0_i32 : i32, i32
  }
  func.func @transform_1(%arg0: i32) -> (i32, i32) {
    %c0_i32 = arith.constant 0 : i32
    %c0_i32_0 = arith.constant 0 : i32
    %c0_i32_1 = arith.constant 0 : i32
    return %c0_i32, %c0_i32_0 : i32, i32
  }
  func.func @transform_2(%arg0: i32) -> (i32, i32) {
    %c0_i32 = arith.constant 0 : i32
    %c0_i32_0 = arith.constant 0 : i32
    %c0_i32_1 = arith.constant 0 : i32
    return %c0_i32, %c0_i32_0 : i32, i32
  }
  func.func @transform_3(%arg0: i32) -> (i32, i32) {
    %c0_i32 = arith.constant 0 : i32
    %c0_i32_0 = arith.constant 0 : i32
    return %arg0, %c0_i32 : i32, i32
  }
}

module attributes {stable_mosaic.version = 11 : i64} {
  func.func @_gate_kernel(%arg0: i32, %arg1: memref<16x32xf32, #tpu.memory_space<vmem>>, %arg2: memref<32x256xbf16, #tpu.memory_space<vmem>>, %arg3: memref<1x256xf32, #tpu.memory_space<vmem>>, %arg4: memref<16x32xf32, #tpu.memory_space<vmem>>) attributes {dimension_semantics = [#tpu.dimension_semantics<parallel>], iteration_bounds = array<i64: 1>, scalar_prefetch = 0 : i64, scratch_operands = 0 : i64, tpu.core_type = #tpu.core_type<tc>, window_params = [{transform_indices = @transform_0, window_bounds = array<i64: 16, 32>}, {pipeline_mode = #tpu.pipeline_mode<synchronous>, transform_indices = @transform_1, window_bounds = array<i64: 32, 256>}, {pipeline_mode = #tpu.pipeline_mode<synchronous>, transform_indices = @transform_2, window_bounds = array<i64: 1, 256>}, {transform_indices = @transform_3, window_bounds = array<i64: 16, 32>}]} {
    %c0 = arith.constant 0 : index
    %c0_0 = arith.constant 0 : index
    %0 = vector.load %arg1[%c0, %c0_0] : memref<16x32xf32, #tpu.memory_space<vmem>>, vector<16x32xf32>
    %1 = arith.truncf %0 : vector<16x32xf32> to vector<16x32xbf16>
    %c0_1 = arith.constant 0 : index
    %c0_2 = arith.constant 0 : index
    %2 = vector.load %arg2[%c0_1, %c0_2] : memref<32x256xbf16, #tpu.memory_space<vmem>>, vector<32x256xbf16>
    %cst = arith.constant dense<0.000000e+00> : vector<16x256xf32>
    %3 = tpu.matmul %1, %2, %cst {dimension_numbers = #tpu.dot_dimension_numbers<[1], [0], [0], [1], [0, 0, 1, 1], [], []>} : vector<16x32xbf16>, vector<32x256xbf16>, vector<16x256xf32> -> vector<16x256xf32>
    %c0_3 = arith.constant 0 : index
    %c0_4 = arith.constant 0 : index
    %4 = vector.load %arg3[%c0_3, %c0_4] : memref<1x256xf32, #tpu.memory_space<vmem>>, vector<1x256xf32>
    %5 = vector.broadcast %4 : vector<1x256xf32> to vector<16x256xf32>
    %6 = arith.addf %3, %5 : vector<16x256xf32>
    %7 = vector.extract_strided_slice %6 {offsets = [0, 0], sizes = [16, 32], strides = [1, 1]} : vector<16x256xf32> to vector<16x32xf32>
    %8 = vector.extract_strided_slice %6 {offsets = [0, 128], sizes = [16, 32], strides = [1, 1]} : vector<16x256xf32> to vector<16x32xf32>
    %9 = arith.mulf %7, %8 : vector<16x32xf32>
    %c0_5 = arith.constant 0 : index
    %c0_6 = arith.constant 0 : index
    %10 = vector.load %arg4[%c0_5, %c0_6] : memref<16x32xf32, #tpu.memory_space<vmem>>, vector<16x32xf32>
    tpu.vector_store %arg4[%c0_5, %c0_6], %9 {strides = array<i32>} : memref<16x32xf32, #tpu.memory_space<vmem>>, vector<16x32xf32>,
    return
  }
  func.func @transform_0(%arg0: i32) -> (i32, i32) {
    %c0_i32 = arith.constant 0 : i32
    %c0_i32_0 = arith.constant 0 : i32
    return %arg0, %c0_i32 : i32, i32
  }
  func.func @transform_1(%arg0: i32) -> (i32, i32) {
    %c0_i32 = arith.constant 0 : i32
    %c0_i32_0 = arith.constant 0 : i32
    %c0_i32_1 = arith.constant 0 : i32
    return %c0_i32, %c0_i32_0 : i32, i32
  }
  func.func @transform_2(%arg0: i32) -> (i32, i32) {
    %c0_i32 = arith.constant 0 : i32
    %c0_i32_0 = arith.constant 0 : i32
    %c0_i32_1 = arith.constant 0 : i32
    return %c0_i32, %c0_i32_0 : i32, i32
  }
  func.func @transform_3(%arg0: i32) -> (i32, i32) {
    %c0_i32 = arith.constant 0 : i32
    %c0_i32_0 = arith.constant 0 : i32
    return %arg0, %c0_i32 : i32, i32
  }
}

</mosaic_0001>

<llo_original>
// kernel: tpu_custom_call.1
$region0: #{tpu_custom_call.1}
  #allocation0 [shape = 'u32[]', space=smem, size = 0x4, offset = 0x4, fixed_abs, tag = 'smem constant byte address 0x4 - core index']
  #allocation1 [shape = 'u32[144,128]{1,0:T(1,128)}', space=vmem, size = 0x12000, scoped, tag = 'internal scratch']
  %s0 = inlined_call_operand.hbm [shape: f32[16,32], index: 0, kind: input, shape index: {}]
  %s1 = inlined_call_operand.hbm [shape: bf16[32,256], index: 1, kind: input, shape index: {}]
  %s2 = inlined_call_operand.vmem [shape: f32[1,256], index: 2, kind: input, shape index: {}]
  %s3 = inlined_call_operand.hbm [shape: f32[16,32], index: 3, kind: output, shape index: {}]
  %s4 = sld [smem:[#allocation0]]
  $region30: #{tpu_custom_call.1} parent=0
    _
  %s6 = ssub.s32 1, %s4
  %s7 = scalar_select 0, %s6, %s4
  $region1: #{tpu_custom_call.1} parent=0
    #allocation2 [shape = 'u8[8192]{0}', space=vmem, size = 0x2000, scoped, tag = 'input window, operand 0, single buffered']
    #allocation3 [shape = 's32[1]{0}', space=sflag, size = 0x4, scoped, tag = 'scoped memory for tpu_custom_call.1']
    #allocation4 [shape = 's32[1]{0}', space=sflag, size = 0x4, scoped, tag = 'scoped memory for tpu_custom_call.1']
    #allocation5 [shape = 'u8[16384]{0}', space=vmem, size = 0x4000, scoped, tag = 'input window, operand 1, single buffered']
    #allocation6 [shape = 's32[1]{0}', space=sflag, size = 0x4, scoped, tag = 'scoped memory for tpu_custom_call.1']
    #allocation7 [shape = 'u8[8192]{0}', space=vmem, size = 0x2000, scoped, tag = 'output window, operand 0, single buffered']
    %8 = vsyncpa [#allocation3], 0
    %9 = vsyncpa [#allocation6], 0
    %10 = vsyncpa [#allocation4], 0
    // Predicated region
    $region2: #{tpu_custom_call.1} parent=1 // pred_check
      _
    $region3: #{tpu_custom_call.1} parent=1 // pred_check_branch
      %12 = sbr.rel (0) target = $region5
    $region4: #{tpu_custom_call.1} parent=1 // pred_region
      %s14 = ssub.s32 256, 256
      %15 = vsyncadd [#allocation3], %s14
      %s16 = sshll.u32 [#allocation2], 4
      %s17 = int_to_ptr.vmem [resolvable:$true] %s16
      %22 = dma.hbm_to_vmem [thread:$0]  %s0, 256, %s17, [#allocation3], 128, 128, 8
    $region5: #{tpu_custom_call.1} parent=1 // pred_fallthru
      _
    // Predicated region
    $region6: #{tpu_custom_call.1} parent=1 // pred_check
      _
    $region7: #{tpu_custom_call.1} parent=1 // pred_check_branch
      %24 = sbr.rel (0) target = $region9
    $region8: #{tpu_custom_call.1} parent=1 // pred_region
      %s26 = ssub.s32 512, 512
      %27 = vsyncadd [#allocation6], %s26
      %s28 = sshll.u32 [#allocation5], 4
      %s29 = int_to_ptr.vmem [resolvable:$true] %s28
      %34 = dma.hbm_to_vmem [thread:$0]  %s1, 512, %s29, [#allocation6], 128, 128, 8
    $region9: #{tpu_custom_call.1} parent=1 // pred_fallthru
      _
    // Predicated region
    $region10: #{tpu_custom_call.1} parent=1 // pred_check
      _
    $region11: #{tpu_custom_call.1} parent=1 // pred_check_branch
      %36 = sbr.rel (0) target = $region13
    $region12: #{tpu_custom_call.1} parent=1 // pred_region
      _
    $region13: #{tpu_custom_call.1} parent=1 // pred_fallthru
      _
    // Predicated region
    $region14: #{tpu_custom_call.1} parent=1 // pred_check
      _
    $region15: #{tpu_custom_call.1} parent=1 // pred_check_branch
      %38 = sbr.rel (0) target = $region17
    $region16: #{tpu_custom_call.1} parent=1 // pred_region
      %39 = dma.done [#allocation3], 256
    $region17: #{tpu_custom_call.1} parent=1 // pred_fallthru
      _
    // Predicated region
    $region18: #{tpu_custom_call.1} parent=1 // pred_check
      _
    $region19: #{tpu_custom_call.1} parent=1 // pred_check_branch
      %41 = sbr.rel (0) target = $region21
    $region20: #{tpu_custom_call.1} parent=1 // pred_region
      %42 = dma.done [#allocation6], 512
    $region21: #{tpu_custom_call.1} parent=1 // pred_fallthru
      _
    %v44 = vld [vmem:[#allocation2] sm:$0xff]
    %v45 = vld [vmem:[#allocation2 + $0x8] sm:$0xff]
    %v46 = vpack.c.bf16 %v45, %v44
    %v47 = vld [vmem:[#allocation5] sm:$0xff]
    %v48 = vld [vmem:[#allocation5 + $0x8] sm:$0xff]
    %v49 = vld [vmem:[#allocation5 + $0x10] sm:$0xff]
    %v50 = vld [vmem:[#allocation5 + $0x18] sm:$0xff]
    %v51 = vld [vmem:[%s2] sm:$0x3]
    %v53 = vlaneseq
    %v54 = vshrl.u32 %v53, 7
    %v55 = vsub.s32 0, %v54
    %v56 = vrot.slane %v51, %v55
    %v57 = vlaneseq
    %v58 = vshrl.u32 %v57, 7
    %v59 = vsub.s32 1, %v58
    %v60 = vrot.slane %v51, %v59
    %v67 = vunpack.c.l.b16 %v47
    %v68 = vunpack.c.h.b16 %v47
    %v69 = vunpack.c.l.b16 %v48
    %v70 = vunpack.c.h.b16 %v48
    %v71 = vunpack.c.l.b16 %v49
    %v72 = vunpack.c.h.b16 %v49
    %v73 = vunpack.c.l.b16 %v50
    %v74 = vunpack.c.h.b16 %v50
    %v75 = vpack.c.b16 %v69, %v67
    %v76 = vpack.c.b16 %v70, %v68
    %v77 = vpack.c.b16 %v73, %v71
    %v78 = vpack.c.b16 %v74, %v72
    %vm83 = vcmask 261120
    %v85 = vsel %vm83, %v46, 0
    %87 = vmatprep.subr.bf16.mxu0 0
    %88 = vmatpush1.bf16.msra.mxu0 0
    %89 = vmatprep.subr.bf16.mxu0 0
    %90 = vmatpush1.bf16.msra.mxu0 0
    %91 = vmatprep.subr.bf16.mxu0 0
    %92 = vmatpush1.bf16.msra.mxu0 0
    %93 = vmatprep.subr.bf16.mxu0 0
    %94 = vmatpush1.bf16.msra.mxu0 0
    %95 = vmatprep.subr.bf16.mxu0 0
    %96 = vmatpush1.bf16.msra.mxu0 0
    %97 = vmatprep.subr.bf16.mxu0 0
    %98 = vmatpush1.bf16.msra.mxu0 0
    %99 = vmatprep.subr.bf16.mxu0 %v78
    %100 = vmatpush1.bf16.msra.mxu0 %v77
    %101 = vmatprep.subr.bf16.mxu0 %v76
    %102 = vmatpush1.bf16.msra.mxu0 %v75
    %103 = vmatprep.subr.bf16.mxu0 0
    %104 = vmatpush2.bf16.msra.mxu0 0
    %105 = vmatprep.subr.bf16.mxu0 0
    %106 = vmatpush2.bf16.msra.mxu0 0
    %107 = vmatprep.subr.bf16.mxu0 0
    %108 = vmatpush2.bf16.msra.mxu0 0
    %109 = vmatprep.subr.bf16.mxu0 0
    %110 = vmatpush2.bf16.msra.mxu0 0
    %111 = vmatprep.subr.bf16.mxu0 0
    %112 = vmatpush2.bf16.msra.mxu0 0
    %113 = vmatprep.subr.bf16.mxu0 0
    %114 = vmatpush2.bf16.msra.mxu0 0
    %115 = vmatprep.subr.bf16.mxu0 0
    %116 = vmatpush2.bf16.msra.mxu0 0
    %117 = vmatprep.subr.bf16.mxu0 0
    %118 = vmatpush2.bf16.msra.mxu0 0
    %119 = vmatprep.mubr.bf16.mxu0 0
    %120 = vmatmul.mubr.bf16.gmra.mxu0 %v85
    %v121 = vpop.f32.mrf.mxu0
    %v122 = vadd.f32 %v56, %v121
    %v123 = vpop.f32.mrf.mxu0
    %v124 = vadd.f32 %v60, %v123
    %v125 = vpop.f32.mrf.mxu0
    %v126 = vadd.f32 %v56, %v125
    %v127 = vpop.f32.mrf.mxu0
    %v128 = vadd.f32 %v60, %v127
    %129 = vdwg.mxu0
    %v130 = vmul.f32 %v122, %v124
    %v131 = vmul.f32 %v126, %v128
    %132 = vst.msk [vmem:[#allocation7] sm:$0xff] %vm83, %v130
    %133 = vst.msk [vmem:[#allocation7 + $0x8] sm:$0xff] %vm83, %v131
    // Predicated region
    $region22: #{tpu_custom_call.1} parent=1 // pred_check
      _
    $region23: #{tpu_custom_call.1} parent=1 // pred_check_branch
      %135 = sbr.rel (0) target = $region25
    $region24: #{tpu_custom_call.1} parent=1 // pred_region
      %s137 = ssub.s32 256, 256
      %138 = vsyncadd [#allocation4], %s137
      %s139 = sshll.u32 [#allocation7], 4
      %s140 = int_to_ptr.vmem [resolvable:$true] %s139
      %145 = dma.vmem_to_hbm [thread:$0]  %s140, 256, %s3, [#allocation4], 128, 128, 8
    $region25: #{tpu_custom_call.1} parent=1 // pred_fallthru
      _
    // Predicated region
    $region26: #{tpu_custom_call.1} parent=1 // pred_check
      _
    $region27: #{tpu_custom_call.1} parent=1 // pred_check_branch
      %147 = sbr.rel (0) target = $region29
    $region28: #{tpu_custom_call.1} parent=1 // pred_region
      %148 = dma.done [#allocation4], 256
    $region29: #{tpu_custom_call.1} parent=1 // pred_fallthru
      _
    %149 = vsyncpa [#allocation3], 1
    %150 = vsyncpa [#allocation6], 1
    %151 = vsyncpa [#allocation4], 1

// kernel: tpu_custom_call.1
$region0: #{tpu_custom_call.1}
  #allocation0 [shape = 'u32[]', space=smem, size = 0x4, offset = 0x4, fixed_abs, tag = 'smem constant byte address 0x4 - core index']
  #allocation1 [shape = 'u32[144,128]{1,0:T(1,128)}', space=vmem, size = 0x12000, scoped, tag = 'internal scratch']
  %s0 = inlined_call_operand.hbm [shape: f32[16,32], index: 0, kind: input, shape index: {}]
  %s1 = inlined_call_operand.hbm [shape: bf16[32,256], index: 1, kind: input, shape index: {}]
  %s2 = inlined_call_operand.vmem [shape: f32[1,256], index: 2, kind: input, shape index: {}]
  %s3 = inlined_call_operand.hbm [shape: f32[16,32], index: 3, kind: output, shape index: {}]
  %s4 = sld [smem:[#allocation0]]
  $region30: #{tpu_custom_call.1} parent=0
    _
  %s6 = ssub.s32 1, %s4
  %s7 = scalar_select 0, %s6, %s4
  $region1: #{tpu_custom_call.1} parent=0
    #allocation2 [shape = 'u8[8192]{0}', space=vmem, size = 0x2000, scoped, tag = 'input window, operand 0, single buffered']
    #allocation3 [shape = 's32[1]{0}', space=sflag, size = 0x4, scoped, tag = 'scoped memory for tpu_custom_call.1']
    #allocation4 [shape = 's32[1]{0}', space=sflag, size = 0x4, scoped, tag = 'scoped memory for tpu_custom_call.1']
    #allocation5 [shape = 'u8[16384]{0}', space=vmem, size = 0x4000, scoped, tag = 'input window, operand 1, single buffered']
    #allocation6 [shape = 's32[1]{0}', space=sflag, size = 0x4, scoped, tag = 'scoped memory for tpu_custom_call.1']
    #allocation7 [shape = 'u8[8192]{0}', space=vmem, size = 0x2000, scoped, tag = 'output window, operand 0, single buffered']
    %8 = vsyncpa [#allocation3], 0
    %9 = vsyncpa [#allocation6], 0
    %10 = vsyncpa [#allocation4], 0
    // Predicated region
    $region2: #{tpu_custom_call.1} parent=1 // pred_check
      _
    $region3: #{tpu_custom_call.1} parent=1 // pred_check_branch
      %12 = sbr.rel (0) target = $region5
    $region4: #{tpu_custom_call.1} parent=1 // pred_region
      %s14 = ssub.s32 256, 256
      %15 = vsyncadd [#allocation3], %s14
      %s16 = sshll.u32 [#allocation2], 4
      %s17 = int_to_ptr.vmem [resolvable:$true] %s16
      %22 = dma.hbm_to_vmem [thread:$0]  %s0, 256, %s17, [#allocation3], 128, 128, 8
    $region5: #{tpu_custom_call.1} parent=1 // pred_fallthru
      _
    // Predicated region
    $region6: #{tpu_custom_call.1} parent=1 // pred_check
      _
    $region7: #{tpu_custom_call.1} parent=1 // pred_check_branch
      %24 = sbr.rel (0) target = $region9
    $region8: #{tpu_custom_call.1} parent=1 // pred_region
      %s26 = ssub.s32 512, 512
      %27 = vsyncadd [#allocation6], %s26
      %s28 = sshll.u32 [#allocation5], 4
      %s29 = int_to_ptr.vmem [resolvable:$true] %s28
      %34 = dma.hbm_to_vmem [thread:$0]  %s1, 512, %s29, [#allocation6], 128, 128, 8
    $region9: #{tpu_custom_call.1} parent=1 // pred_fallthru
      _
    // Predicated region
    $region10: #{tpu_custom_call.1} parent=1 // pred_check
      _
    $region11: #{tpu_custom_call.1} parent=1 // pred_check_branch
      %36 = sbr.rel (0) target = $region13
    $region12: #{tpu_custom_call.1} parent=1 // pred_region
      _
    $region13: #{tpu_custom_call.1} parent=1 // pred_fallthru
      _
    // Predicated region
    $region14: #{tpu_custom_call.1} parent=1 // pred_check
      _
    $region15: #{tpu_custom_call.1} parent=1 // pred_check_branch
      %38 = sbr.rel (0) target = $region17
    $region16: #{tpu_custom_call.1} parent=1 // pred_region
      %39 = dma.done [#allocation3], 256
    $region17: #{tpu_custom_call.1} parent=1 // pred_fallthru
      _
    // Predicated region
    $region18: #{tpu_custom_call.1} parent=1 // pred_check
      _
    $region19: #{tpu_custom_call.1} parent=1 // pred_check_branch
      %41 = sbr.rel (0) target = $region21
    $region20: #{tpu_custom_call.1} parent=1 // pred_region
      %42 = dma.done [#allocation6], 512
    $region21: #{tpu_custom_call.1} parent=1 // pred_fallthru
      _
    %v44 = vld [vmem:[#allocation2] sm:$0xff]
    %v45 = vld [vmem:[#allocation2 + $0x8] sm:$0xff]
    %v46 = vpack.c.bf16 %v45, %v44
    %v47 = vld [vmem:[#allocation5] sm:$0xff]
    %v48 = vld [vmem:[#allocation5 + $0x8] sm:$0xff]
    %v49 = vld [vmem:[#allocation5 + $0x10] sm:$0xff]
    %v50 = vld [vmem:[#allocation5 + $0x18] sm:$0xff]
    %v51 = vld [vmem:[%s2] sm:$0x3]
    %v53 = vlaneseq
    %v54 = vshrl.u32 %v53, 7
    %v55 = vsub.s32 0, %v54
    %v56 = vrot.slane %v51, %v55
    %v57 = vlaneseq
    %v58 = vshrl.u32 %v57, 7
    %v59 = vsub.s32 1, %v58
    %v60 = vrot.slane %v51, %v59
    %v67 = vunpack.c.l.b16 %v47
    %v68 = vunpack.c.h.b16 %v47
    %v69 = vunpack.c.l.b16 %v48
    %v70 = vunpack.c.h.b16 %v48
    %v71 = vunpack.c.l.b16 %v49
    %v72 = vunpack.c.h.b16 %v49
    %v73 = vunpack.c.l.b16 %v50
    %v74 = vunpack.c.h.b16 %v50
    %v75 = vpack.c.b16 %v69, %v67
    %v76 = vpack.c.b16 %v70, %v68
    %v77 = vpack.c.b16 %v73, %v71
    %v78 = vpack.c.b16 %v74, %v72
    %vm83 = vcmask 261120
    %v85 = vsel %vm83, %v46, 0
    %87 = vmatprep.subr.bf16.mxu0 0
    %88 = vmatpush1.bf16.msra.mxu0 0
    %89 = vmatprep.subr.bf16.mxu0 0
    %90 = vmatpush1.bf16.msra.mxu0 0
    %91 = vmatprep.subr.bf16.mxu0 0
    %92 = vmatpush1.bf16.msra.mxu0 0
    %93 = vmatprep.subr.bf16.mxu0 0
    %94 = vmatpush1.bf16.msra.mxu0 0
    %95 = vmatprep.subr.bf16.mxu0 0
    %96 = vmatpush1.bf16.msra.mxu0 0
    %97 = vmatprep.subr.bf16.mxu0 0
    %98 = vmatpush1.bf16.msra.mxu0 0
    %99 = vmatprep.subr.bf16.mxu0 %v78
    %100 = vmatpush1.bf16.msra.mxu0 %v77
    %101 = vmatprep.subr.bf16.mxu0 %v76
    %102 = vmatpush1.bf16.msra.mxu0 %v75
    %103 = vmatprep.subr.bf16.mxu0 0
    %104 = vmatpush2.bf16.msra.mxu0 0
    %105 = vmatprep.subr.bf16.mxu0 0
    %106 = vmatpush2.bf16.msra.mxu0 0
    %107 = vmatprep.subr.bf16.mxu0 0
    %108 = vmatpush2.bf16.msra.mxu0 0
    %109 = vmatprep.subr.bf16.mxu0 0
    %110 = vmatpush2.bf16.msra.mxu0 0
    %111 = vmatprep.subr.bf16.mxu0 0
    %112 = vmatpush2.bf16.msra.mxu0 0
    %113 = vmatprep.subr.bf16.mxu0 0
    %114 = vmatpush2.bf16.msra.mxu0 0
    %115 = vmatprep.subr.bf16.mxu0 0
    %116 = vmatpush2.bf16.msra.mxu0 0
    %117 = vmatprep.subr.bf16.mxu0 0
    %118 = vmatpush2.bf16.msra.mxu0 0
    %119 = vmatprep.mubr.bf16.mxu0 0
    %120 = vmatmul.mubr.bf16.gmra.mxu0 %v85
    %v121 = vpop.f32.mrf.mxu0
    %v122 = vadd.f32 %v56, %v121
    %v123 = vpop.f32.mrf.mxu0
    %v124 = vadd.f32 %v60, %v123
    %v125 = vpop.f32.mrf.mxu0
    %v126 = vadd.f32 %v56, %v125
    %v127 = vpop.f32.mrf.mxu0
    %v128 = vadd.f32 %v60, %v127
    %129 = vdwg.mxu0
    %v130 = vmul.f32 %v122, %v124
    %v131 = vmul.f32 %v126, %v128
    %132 = vst.msk [vmem:[#allocation7] sm:$0xff] %vm83, %v130
    %133 = vst.msk [vmem:[#allocation7 + $0x8] sm:$0xff] %vm83, %v131
    // Predicated region
    $region22: #{tpu_custom_call.1} parent=1 // pred_check
      _
    $region23: #{tpu_custom_call.1} parent=1 // pred_check_branch
      %135 = sbr.rel (0) target = $region25
    $region24: #{tpu_custom_call.1} parent=1 // pred_region
      %s137 = ssub.s32 256, 256
      %138 = vsyncadd [#allocation4], %s137
      %s139 = sshll.u32 [#allocation7], 4
      %s140 = int_to_ptr.vmem [resolvable:$true] %s139
      %145 = dma.vmem_to_hbm [thread:$0]  %s140, 256, %s3, [#allocation4], 128, 128, 8
    $region25: #{tpu_custom_call.1} parent=1 // pred_fallthru
      _
    // Predicated region
    $region26: #{tpu_custom_call.1} parent=1 // pred_check
      _
    $region27: #{tpu_custom_call.1} parent=1 // pred_check_branch
      %147 = sbr.rel (0) target = $region29
    $region28: #{tpu_custom_call.1} parent=1 // pred_region
      %148 = dma.done [#allocation4], 256
    $region29: #{tpu_custom_call.1} parent=1 // pred_fallthru
      _
    %149 = vsyncpa [#allocation3], 1
    %150 = vsyncpa [#allocation6], 1
    %151 = vsyncpa [#allocation4], 1

</llo_original>
